<compile_context>
chip_gen: v7x
topology: tpu7x:2x2x1
jax: 0.10.0
libtpu: 0.0.40
codegen_flags: <defaults>
</compile_context>

<pallas_src>
import numpy as np
import jax
import jax.numpy as jnp
from jax import lax
from jax.experimental import pallas as pl
from jax.experimental.pallas import tpu as pltpu

VMEM_SPEC = pl.BlockSpec(memory_space=pltpu.MemorySpace.VMEM)
LANE = 128
SUBLANE = 8
_COMPILER_PARAMS = pltpu.CompilerParams(vmem_limit_bytes=32 * 1024 * 1024)


# ----------------------------- in-kernel helpers ----------------------------

def _gcn_stack(a_ref, nx_ref, keep_ref, cw_ref, cb_ref):
    """h = node_x * keep;  for each layer: h = A_hat @ (h @ W_l) + b_l."""
    h = nx_ref[...] * keep_ref[...]                      # zero unknown rows
    for l in range(cw_ref.shape[0]):                     # static unroll over layers
        hw = jnp.dot(h, cw_ref[l], preferred_element_type=jnp.float32)
        h = jnp.dot(a_ref[...], hw, preferred_element_type=jnp.float32) + cb_ref[l]
    return h


def _mlp(h0, w1_ref, b1_ref, w2_ref, b2_ref, w3_ref, b3_ref):
    h1 = jnp.maximum(
        jnp.dot(h0, w1_ref[...], preferred_element_type=jnp.float32) + b1_ref[...], 0.0)
    h2 = jnp.maximum(
        jnp.dot(h1, w2_ref[...], preferred_element_type=jnp.float32) + b2_ref[...], 0.0)
    return jnp.dot(h2, w3_ref[...], preferred_element_type=jnp.float32) + b3_ref[...]


# ------------------------------ Pallas kernels ------------------------------

def _backbone_kernel(x_ref, wp_ref, w1_ref, b1_ref, w2_ref, b2_ref,
                     w3_ref, b3_ref, out_ref):
    h0 = jnp.dot(x_ref[...], wp_ref[...], preferred_element_type=jnp.float32)
    out_ref[...] = _mlp(h0, w1_ref, b1_ref, w2_ref, b2_ref, w3_ref, b3_ref)


def _fused_train_kernel(a_ref, nx_ref, keep_ref, cw_ref, cb_ref, sel_ref,
                        xk_ref, wk_ref, xu_ref, wu_ref,
                        w1_ref, b1_ref, w2_ref, b2_ref, w3_ref, b3_ref,
                        out_ref, recon_ref):
    # --- GCN supernet, all layers fused, H resident in VMEM -----------------
    h = _gcn_stack(a_ref, nx_ref, keep_ref, cw_ref, cb_ref)             # (M, D)
    # --- gather w_pred[:feat][uin_idx] as one MXU matmul ---------------------
    wpu = jnp.dot(sel_ref[...], h, preferred_element_type=jnp.float32)  # (U, D)
    # --- backbone, split-K (no concat of [w_known; w_pred_unknown]) ----------
    h0 = (jnp.dot(xk_ref[...], wk_ref[...], preferred_element_type=jnp.float32) +
          jnp.dot(xu_ref[...], wpu, preferred_element_type=jnp.float32))
    out_ref[...] = _mlp(h0, w1_ref, b1_ref, w2_ref, b2_ref, w3_ref, b3_ref)
    # --- recon loss: sim = w_unknown @ wpu.T ; -mean(diag - logsumexp(row)) --
    sim = lax.dot_general(wu_ref[...], wpu, (((1,), (1,)), ((), ())),
                          preferred_element_type=jnp.float32)           # (U, U)
    U = sim.shape[0]
    r = lax.broadcasted_iota(jnp.int32, (U, U), 0)
    c = lax.broadcasted_iota(jnp.int32, (U, U), 1)
    diag = jnp.sum(jnp.where(r == c, sim, 0.0), axis=1, keepdims=True)   # (U,1)
    m = jnp.max(sim, axis=1, keepdims=True)
    lse = jnp.log(jnp.sum(jnp.exp(sim - m), axis=1, keepdims=True)) + m  # (U,1)
    per_row = diag - lse
    recon_ref[...] = -(jnp.sum(per_row, axis=(0, 1), keepdims=True) / float(U))


def _fused_test_kernel(a_ref, nx_ref, keep_ref, cw_ref, cb_ref, sel_ref,
                       xo_ref, wo_ref, xn_ref,
                       w1_ref, b1_ref, w2_ref, b2_ref, w3_ref, b3_ref,
                       out_ref):
    h = _gcn_stack(a_ref, nx_ref, keep_ref, cw_ref, cb_ref)              # (M, D)
    wpn = jnp.dot(sel_ref[...], h, preferred_element_type=jnp.float32)   # (Nn, D)
    h0 = (jnp.dot(xo_ref[...], wo_ref[...], preferred_element_type=jnp.float32) +
          jnp.dot(xn_ref[...], wpn, preferred_element_type=jnp.float32))
    out_ref[...] = _mlp(h0, w1_ref, b1_ref, w2_ref, b2_ref, w3_ref, b3_ref)


# ------------------------------- wrappers -----------------------------------

def _pad_last(a, width=LANE):
    pad = (-a.shape[-1]) % width
    if pad == 0:
        return a
    return jnp.pad(a, [(0, 0)] * (a.ndim - 1) + [(0, pad)])


def _pad_rows(a, width=SUBLANE):
    pad = (-a.shape[0]) % width
    if pad == 0:
        return a
    return jnp.pad(a, [(0, pad)] + [(0, 0)] * (a.ndim - 1))


def _nn_operands(nn_params):
    """(w1,b1,w2,b2,w3_padded,b3_padded) with lane-dense (mult of 128) head."""
    (w1, b1), (w2, b2), (w3, b3) = nn_params
    C = w3.shape[1]
    return (w1, b1.reshape(1, -1), w2, b2.reshape(1, -1),
            _pad_last(w3), _pad_last(b3.reshape(1, -1))), C


def backbone_apply(x_, w_proxy, nn_params):
    nn_ops, C = _nn_operands(nn_params)
    B = x_.shape[0]
    x_p = _pad_rows(x_)                                   # sublane-dense batch
    Bp, D, Cp = x_p.shape[0], w_proxy.shape[1], nn_ops[-1].shape[1]
    operands = (x_p, w_proxy) + nn_ops
    cost = pl.CostEstimate(
        flops=int(2 * Bp * (x_p.shape[1] * D + 2 * D * D + D * Cp)),
        transcendentals=0,
        bytes_accessed=int(sum(int(np.prod(t.shape)) * 4 for t in operands)
                           + Bp * Cp * 4))
    out = pl.pallas_call(
        _backbone_kernel,
        out_shape=jax.ShapeDtypeStruct((Bp, Cp), jnp.float32),
        in_specs=[VMEM_SPEC] * len(operands),
        out_specs=VMEM_SPEC,
        compiler_params=_COMPILER_PARAMS,
        cost_estimate=cost,
    )(*operands)
    return out[:B, :C]


def fused_train_apply(a_hat, node_x, keep, conv_w, conv_b, sel,
                      x_known, w_known, x_unknown, w_unknown, nn_params):
    nn_ops, C = _nn_operands(nn_params)
    B = x_known.shape[0]
    xk_p, xu_p = _pad_rows(x_known), _pad_rows(x_unknown)
    Bp = xk_p.shape[0]
    M, D = node_x.shape
    L, U, K = conv_w.shape[0], sel.shape[0], x_known.shape[1]
    Cp = nn_ops[-1].shape[1]
    operands = (a_hat, node_x, keep, conv_w, conv_b, sel,
                xk_p, w_known, xu_p, w_unknown) + nn_ops
    flops = (2 * L * (M * D * D + M * M * D) + 2 * U * M * D
             + 2 * Bp * (K + U) * D + 4 * Bp * D * D + 2 * Bp * D * Cp
             + 2 * U * U * D)
    cost = pl.CostEstimate(
        flops=int(flops), transcendentals=int(U * U + U),
        bytes_accessed=int(sum(int(np.prod(t.shape)) * 4 for t in operands)
                           + Bp * Cp * 4 + 4))
    out, recon = pl.pallas_call(
        _fused_train_kernel,
        out_shape=(jax.ShapeDtypeStruct((Bp, Cp), jnp.float32),
                   jax.ShapeDtypeStruct((1, 1), jnp.float32)),
        in_specs=[VMEM_SPEC] * len(operands),
        out_specs=(VMEM_SPEC, VMEM_SPEC),
        compiler_params=_COMPILER_PARAMS,
        cost_estimate=cost,
    )(*operands)
    return out[:B, :C], recon[0, 0]


def fused_test_apply(a_hat, node_x, keep, conv_w, conv_b, sel,
                     x_old, w_old, x_new, nn_params):
    nn_ops, C = _nn_operands(nn_params)
    B = x_old.shape[0]
    xo_p, xn_p = _pad_rows(x_old), _pad_rows(x_new)
    Bp = xo_p.shape[0]
    M, D = node_x.shape
    L, Nn = conv_w.shape[0], sel.shape[0]
    Cp = nn_ops[-1].shape[1]
    operands = (a_hat, node_x, keep, conv_w, conv_b, sel,
                xo_p, w_old, xn_p) + nn_ops
    flops = (2 * L * (M * D * D + M * M * D) + 2 * Nn * M * D
             + 2 * Bp * (x_old.shape[1] + Nn) * D + 4 * Bp * D * D
             + 2 * Bp * D * Cp)
    cost = pl.CostEstimate(
        flops=int(flops), transcendentals=0,
        bytes_accessed=int(sum(int(np.prod(t.shape)) * 4 for t in operands)
                           + Bp * Cp * 4))
    out = pl.pallas_call(
        _fused_test_kernel,
        out_shape=jax.ShapeDtypeStruct((Bp, Cp), jnp.float32),
        in_specs=[VMEM_SPEC] * len(operands),
        out_specs=VMEM_SPEC,
        compiler_params=_COMPILER_PARAMS,
        cost_estimate=cost,
    )(*operands)
    return out[:B, :C]


# ------------------------------- glue / model -------------------------------

def normalized_adjacency(edge_index, num_nodes):
    """Dense GCN-normalized adjacency D^-1/2 (A + I) D^-1/2 (host, once/graph)."""
    A = np.zeros((num_nodes, num_nodes), np.float32)
    src, dst = np.asarray(edge_index)
    A[dst, src] = 1.0
    A = A + np.eye(num_nodes, dtype=np.float32)
    deg = A.sum(axis=1)
    dinv = 1.0 / np.sqrt(np.maximum(deg, 1e-12))
    return (dinv[:, None] * A) * dinv[None, :]


def init_params(key, feat_num, hidden, class_num, gnn_layers):
    n_keys = 1 + 3 * 2 + gnn_layers
    ks = iter(jax.random.split(key, n_keys))

    def xavier(k, fan_in, fan_out):
        bound = float(np.sqrt(6.0 / (fan_in + fan_out)))
        return jax.random.uniform(k, (fan_in, fan_out), jnp.float32, -bound, bound)

    def linear(k_w, k_b, fan_in, fan_out):
        bound = float(1.0 / np.sqrt(fan_in))
        W = jax.random.uniform(k_w, (fan_in, fan_out), jnp.float32, -bound, bound)
        b = jax.random.uniform(k_b, (fan_out,), jnp.float32, -bound, bound)
        return W, b

    w = xavier(next(ks), feat_num, hidden)                    # backbone.w
    nn_params = [linear(next(ks), next(ks), hidden, hidden),
                 linear(next(ks), next(ks), hidden, hidden),
                 linear(next(ks), next(ks), hidden, class_num)]
    conv_w = jnp.stack([xavier(next(ks), hidden, hidden)
                        for _ in range(gnn_layers)])          # (L, D, D)
    conv_b = jnp.zeros((gnn_layers, 1, hidden), jnp.float32)  # (L, 1, D)
    return dict(w=w, nn=nn_params, conv_w=conv_w, conv_b=conv_b)


def model_forward(params, x, feature_mask, data=None, known_mask=None,
                  new_feature_mask=None, mode="train"):
    w = params["w"]
    nn_params = params["nn"]
    conv_w, conv_b = params["conv_w"], params["conv_b"]
    feature_mask = np.asarray(feature_mask)

    if mode == "pretrain":
        fidx = np.where(feature_mask)[0]
        return backbone_apply(x[:, fidx], w[fidx], nn_params)

    elif mode == "train":
        known_mask = np.asarray(known_mask)
        unknown_mask = feature_mask & (~known_mask)
        kidx = np.where(known_mask)[0]
        uidx = np.where(unknown_mask)[0]
        uin_idx = np.where(unknown_mask[feature_mask])[0]
        feature_num = int(feature_mask.sum())

        if uidx.size == 0:  # guard: recon undefined for 0 unknown features
            out = backbone_apply(x[:, kidx], w[kidx], nn_params)
            return out, jnp.float32(0.0)

        tidx = np.where(np.asarray(data["train_node_mask"]))[0]
        assert tidx.size >= feature_num, "need #train nodes >= #active features"
        a_hat = data["a_hat_train"]                 # precomputed once per graph
        M = int(a_hat.shape[0])

        # row-keep mask: zero unknown-feature rows of data.x (applied in-kernel)
        keep_full = np.ones(int(data["x"].shape[0]), np.float32)
        keep_full[:feature_mask.shape[0]][unknown_mask] = 0.0
        keep = jnp.asarray(keep_full[tidx].reshape(-1, 1))
        node_x = data["x"][tidx]

        # selection matrix: w_pred_unknown = sel @ gcn_out
        sel = np.zeros((uidx.size, M), np.float32)
        sel[np.arange(uidx.size), uin_idx] = 1.0

        w_known = w[kidx]
        w_unknown = jax.lax.stop_gradient(w[uidx])  # .detach()
        return fused_train_apply(a_hat, node_x, keep, conv_w, conv_b,
                                 jnp.asarray(sel), x[:, kidx], w_known,
                                 x[:, uidx], w_unknown, nn_params)

    elif mode == "test":
        new_feature_mask = np.asarray(new_feature_mask)
        fidx = np.where(feature_mask)[0]
        nidx = np.where(new_feature_mask)[0]
        feature_num = feature_mask.shape[0]

        if nidx.size == 0:
            return backbone_apply(x[:, fidx], w[fidx], nn_params)

        a_hat = data["a_hat"]                       # precomputed once per graph
        M = int(a_hat.shape[0])
        assert M >= feature_num

        keep_full = np.ones(int(data["x"].shape[0]), np.float32)
        keep_full[:feature_mask.shape[0]][~feature_mask] = 0.0
        keep = jnp.asarray(keep_full.reshape(-1, 1))

        sel = np.zeros((nidx.size, M), np.float32)
        sel[np.arange(nidx.size), nidx] = 1.0

        return fused_test_apply(a_hat, data["x"], keep, conv_w, conv_b,
                                jnp.asarray(sel), x[:, fidx], w[fidx],
                                x[:, nidx], nn_params)

    raise NotImplementedError(mode)


# ----------------------------- numpy references ------------------------------

def _np_mlp(h, nn_p):
    (W1, b1), (W2, b2), (W3, b3) = nn_p
    h = np.maximum(h @ W1 + b1, 0.0)
    h = np.maximum(h @ W2 + b2, 0.0)
    return h @ W3 + b3


def _np_gcn(node_x, a_hat, cw, cb):
    h = node_x
    for l in range(cw.shape[0]):
        h = a_hat @ (h @ cw[l]) + cb[l]
    return h


def reference_pretrain(params, x, feature_mask):
    w = np.asarray(params["w"])
    nn_p = [(np.asarray(W), np.asarray(b)) for W, b in params["nn"]]
    fm = np.asarray(feature_mask)
    return _np_mlp(np.asarray(x)[:, fm] @ w[fm], nn_p)


def reference_train(params, x, feature_mask, known_mask, data):
    w = np.asarray(params["w"])
    nn_p = [(np.asarray(W), np.asarray(b)) for W, b in params["nn"]]
    cw, cb = np.asarray(params["conv_w"]), np.asarray(params["conv_b"])
    fm, km = np.asarray(feature_mask), np.asarray(known_mask)
    unknown = fm & ~km
    kidx, uidx = np.where(km)[0], np.where(unknown)[0]
    feature_num = int(fm.sum())

    node_x = np.asarray(data["x"]).copy()
    node_x[:fm.shape[0]][unknown] = 0.0
    tidx = np.where(np.asarray(data["train_node_mask"]))[0]
    h = _np_gcn(node_x[tidx], np.asarray(data["a_hat_train"]), cw, cb)
    w_pred_unknown = h[:feature_num][unknown[fm]]

    w_ = np.concatenate([w[kidx], w_pred_unknown], 0)
    x_np = np.asarray(x)
    x_ = np.concatenate([x_np[:, kidx], x_np[:, uidx]], 1)
    out = _np_mlp(x_ @ w_, nn_p)

    sim = w[uidx] @ w_pred_unknown.T
    m = sim.max(1, keepdims=True)
    lse = np.log(np.sum(np.exp(sim - m), 1)) + m[:, 0]
    recon = -np.mean(np.diag(sim) - lse)
    return out, recon


def reference_test(params, x, feature_mask, new_feature_mask, data):
    w = np.asarray(params["w"])
    nn_p = [(np.asarray(W), np.asarray(b)) for W, b in params["nn"]]
    cw, cb = np.asarray(params["conv_w"]), np.asarray(params["conv_b"])
    fm, nm = np.asarray(feature_mask), np.asarray(new_feature_mask)
    feature_num = fm.shape[0]

    node_x = np.asarray(data["x"]).copy()
    node_x[:fm.shape[0]][~fm] = 0.0
    h = _np_gcn(node_x, np.asarray(data["a_hat"]), cw, cb)
    w_pred_new = h[:feature_num][nm]

    w_ = np.concatenate([w[fm], w_pred_new], 0)
    x_np = np.asarray(x)
    x_ = np.concatenate([x_np[:, fm], x_np[:, nm]], 1)
    return _np_mlp(x_ @ w_, nn_p)


# ----------------------------------- main ------------------------------------

if __name__ == "__main__":
    feat_num, hidden, class_num, batch = 16, 32, 4, 8
    gnn_layer_num, num_nodes = 2, 24

    key = jax.random.PRNGKey(0)
    kp, kx, kd = jax.random.split(key, 3)
    params = init_params(kp, feat_num, hidden, class_num, gnn_layer_num)

    x = jax.random.normal(kx, (batch, feat_num), jnp.float32)
    node_x = jax.random.normal(kd, (num_nodes, hidden), jnp.float32)

    feature_mask = np.zeros(feat_num, bool); feature_mask[:12] = True
    known_mask = np.zeros(feat_num, bool); known_mask[:8] = True
    new_feature_mask = np.zeros(feat_num, bool); new_feature_mask[12:] = True

    ring = np.arange(num_nodes)
    src = np.concatenate([ring, (ring + 1) % num_nodes])
    dst = np.concatenate([(ring + 1) % num_nodes, ring])
    edge_index = np.stack([src, dst]).astype(np.int32)

    train_node_mask = np.ones(num_nodes, bool)
    # A_hat precomputed once per graph (hoisted out of the forward path).
    a_hat_full = jnp.asarray(normalized_adjacency(edge_index, num_nodes))
    a_hat_train = jnp.asarray(
        normalized_adjacency(edge_index, int(train_node_mask.sum())))

    data = dict(x=node_x,
                train_node_mask=train_node_mask,
                a_hat_train=a_hat_train,
                a_hat=a_hat_full)

    out_pre = model_forward(params, x, feature_mask, mode="pretrain")
    out_train, w_recon = model_forward(params, x, feature_mask, data=data,
                                       known_mask=known_mask, mode="train")
    out_test = model_forward(params, x, feature_mask, data=data,
                             new_feature_mask=new_feature_mask, mode="test")
    jax.block_until_ready((out_pre, out_train, w_recon, out_test))

    ref_pre = reference_pretrain(params, x, feature_mask)
    ref_out, ref_recon = reference_train(params, x, feature_mask, known_mask, data)
    ref_test = reference_test(params, x, feature_mask, new_feature_mask, data)

    assert out_pre.shape == (batch, class_num)
    assert out_train.shape == (batch, class_num)
    assert out_test.shape == (batch, class_num)
    assert np.allclose(np.asarray(out_pre), ref_pre, atol=1e-2, rtol=1e-2)
    assert np.allclose(np.asarray(out_train), ref_out, atol=1e-2, rtol=1e-2)
    assert np.allclose(float(w_recon), float(ref_recon), atol=1e-2, rtol=1e-2)
    assert np.allclose(np.asarray(out_test), ref_test, atol=1e-2, rtol=1e-2)

    print("KERNEL_OK")
</pallas_src>

<mosaic_0001>
module attributes {stable_mosaic.version = 11 : i64} {
  func.func @_backbone_kernel(%arg0: memref<8x12xf32, #tpu.memory_space<vmem>>, %arg1: memref<12x32xf32, #tpu.memory_space<vmem>>, %arg2: memref<32x32xf32, #tpu.memory_space<vmem>>, %arg3: memref<1x32xf32, #tpu.memory_space<vmem>>, %arg4: memref<32x32xf32, #tpu.memory_space<vmem>>, %arg5: memref<1x32xf32, #tpu.memory_space<vmem>>, %arg6: memref<32x128xf32, #tpu.memory_space<vmem>>, %arg7: memref<1x128xf32, #tpu.memory_space<vmem>>, %arg8: memref<8x128xf32, #tpu.memory_space<vmem>>) attributes {dimension_semantics = [], scalar_prefetch = 0 : i64, scratch_operands = 0 : i64, tpu.core_type = #tpu.core_type<tc>} {
    %c0 = arith.constant 0 : index
    %c0_0 = arith.constant 0 : index
    %0 = vector.load %arg0[%c0, %c0_0] : memref<8x12xf32, #tpu.memory_space<vmem>>, vector<8x12xf32>
    %c0_1 = arith.constant 0 : index
    %c0_2 = arith.constant 0 : index
    %1 = vector.load %arg1[%c0_1, %c0_2] : memref<12x32xf32, #tpu.memory_space<vmem>>, vector<12x32xf32>
    %cst = arith.constant dense<0.000000e+00> : vector<8x32xf32>
    %2 = tpu.matmul %0, %1, %cst {dimension_numbers = #tpu.dot_dimension_numbers<[1], [0], [0], [1], [0, 0, 1, 1], [], []>} : vector<8x12xf32>, vector<12x32xf32>, vector<8x32xf32> -> vector<8x32xf32>
    %c0_3 = arith.constant 0 : index
    %c0_4 = arith.constant 0 : index
    %3 = vector.load %arg2[%c0_3, %c0_4] : memref<32x32xf32, #tpu.memory_space<vmem>>, vector<32x32xf32>
    %cst_5 = arith.constant dense<0.000000e+00> : vector<8x32xf32>
    %4 = tpu.matmul %2, %3, %cst_5 {dimension_numbers = #tpu.dot_dimension_numbers<[1], [0], [0], [1], [0, 0, 1, 1], [], []>} : vector<8x32xf32>, vector<32x32xf32>, vector<8x32xf32> -> vector<8x32xf32>
    %c0_6 = arith.constant 0 : index
    %c0_7 = arith.constant 0 : index
    %5 = vector.load %arg3[%c0_6, %c0_7] : memref<1x32xf32, #tpu.memory_space<vmem>>, vector<1x32xf32>
    %6 = vector.broadcast %5 : vector<1x32xf32> to vector<8x32xf32>
    %7 = arith.addf %4, %6 : vector<8x32xf32>
    %cst_8 = arith.constant 0.000000e+00 : f32
    %8 = vector.broadcast %cst_8 : f32 to vector<8x32xf32>
    %9 = arith.maximumf %7, %8 : vector<8x32xf32>
    %c0_9 = arith.constant 0 : index
    %c0_10 = arith.constant 0 : index
    %10 = vector.load %arg4[%c0_9, %c0_10] : memref<32x32xf32, #tpu.memory_space<vmem>>, vector<32x32xf32>
    %cst_11 = arith.constant dense<0.000000e+00> : vector<8x32xf32>
    %11 = tpu.matmul %9, %10, %cst_11 {dimension_numbers = #tpu.dot_dimension_numbers<[1], [0], [0], [1], [0, 0, 1, 1], [], []>} : vector<8x32xf32>, vector<32x32xf32>, vector<8x32xf32> -> vector<8x32xf32>
    %c0_12 = arith.constant 0 : index
    %c0_13 = arith.constant 0 : index
    %12 = vector.load %arg5[%c0_12, %c0_13] : memref<1x32xf32, #tpu.memory_space<vmem>>, vector<1x32xf32>
    %13 = vector.broadcast %12 : vector<1x32xf32> to vector<8x32xf32>
    %14 = arith.addf %11, %13 : vector<8x32xf32>
    %cst_14 = arith.constant 0.000000e+00 : f32
    %15 = vector.broadcast %cst_14 : f32 to vector<8x32xf32>
    %16 = arith.maximumf %14, %15 : vector<8x32xf32>
    %c0_15 = arith.constant 0 : index
    %c0_16 = arith.constant 0 : index
    %17 = vector.load %arg6[%c0_15, %c0_16] : memref<32x128xf32, #tpu.memory_space<vmem>>, vector<32x128xf32>
    %cst_17 = arith.constant dense<0.000000e+00> : vector<8x128xf32>
    %18 = tpu.matmul %16, %17, %cst_17 {dimension_numbers = #tpu.dot_dimension_numbers<[1], [0], [0], [1], [0, 0, 1, 1], [], []>} : vector<8x32xf32>, vector<32x128xf32>, vector<8x128xf32> -> vector<8x128xf32>
    %c0_18 = arith.constant 0 : index
    %c0_19 = arith.constant 0 : index
    %19 = vector.load %arg7[%c0_18, %c0_19] : memref<1x128xf32, #tpu.memory_space<vmem>>, vector<1x128xf32>
    %20 = vector.broadcast %19 : vector<1x128xf32> to vector<8x128xf32>
    %21 = arith.addf %18, %20 : vector<8x128xf32>
    %c0_20 = arith.constant 0 : index
    %c0_21 = arith.constant 0 : index
    %22 = vector.load %arg8[%c0_20, %c0_21] : memref<8x128xf32, #tpu.memory_space<vmem>>, vector<8x128xf32>
    tpu.vector_store %arg8[%c0_20, %c0_21], %21 {strides = array<i32>} : memref<8x128xf32, #tpu.memory_space<vmem>>, vector<8x128xf32>,
    return
  }
}

</mosaic_0001>

<llo_original>
// kernel: tpu_custom_call.1
$region0: #{tpu_custom_call.1}
  #allocation0 [shape = 'u32[]', space=smem, size = 0x4, offset = 0x4, fixed_abs, tag = 'smem constant byte address 0x4 - core index']
  #allocation1 [shape = 'u32[144,128]{1,0:T(1,128)}', space=vmem, size = 0x12000, scoped, tag = 'internal scratch']
  %s0 = inlined_call_operand.hbm [shape: f32[8,12], index: 0, kind: input, shape index: {}]
  %s1 = inlined_call_operand.hbm [shape: f32[12,32], index: 1, kind: input, shape index: {}]
  %s2 = inlined_call_operand.hbm [shape: f32[32,32], index: 2, kind: input, shape index: {}]
  %s3 = inlined_call_operand.vmem [shape: f32[1,32], index: 3, kind: input, shape index: {}]
  %s4 = inlined_call_operand.hbm [shape: f32[32,32], index: 4, kind: input, shape index: {}]
  %s5 = inlined_call_operand.vmem [shape: f32[1,32], index: 5, kind: input, shape index: {}]
  %s6 = inlined_call_operand.hbm [shape: f32[32,128], index: 6, kind: input, shape index: {}]
  %s7 = inlined_call_operand.vmem [shape: f32[1,128], index: 7, kind: input, shape index: {}]
  %s8 = inlined_call_operand.hbm [shape: f32[8,128], index: 8, kind: output, shape index: {}]
  %s9 = sld [smem:[#allocation0]]
  $region62: #{tpu_custom_call.1} parent=0
    _
  %s11 = ssub.s32 1, %s9
  %s12 = scalar_select 0, %s11, %s9
  $region1: #{tpu_custom_call.1} parent=0
    #allocation2 [shape = 'u8[4096]{0}', space=vmem, size = 0x1000, scoped, tag = 'input window, operand 0, single buffered']
    #allocation3 [shape = 's32[1]{0}', space=sflag, size = 0x4, scoped, tag = 'scoped memory for tpu_custom_call.1']
    #allocation4 [shape = 's32[1]{0}', space=sflag, size = 0x4, scoped, tag = 'scoped memory for tpu_custom_call.1']
    #allocation5 [shape = 'u8[8192]{0}', space=vmem, size = 0x2000, scoped, tag = 'input window, operand 1, single buffered']
    #allocation6 [shape = 's32[1]{0}', space=sflag, size = 0x4, scoped, tag = 'scoped memory for tpu_custom_call.1']
    #allocation7 [shape = 'u8[16384]{0}', space=vmem, size = 0x4000, scoped, tag = 'input window, operand 2, single buffered']
    #allocation8 [shape = 'u8[16384]{0}', space=vmem, size = 0x4000, scoped, tag = 'input window, operand 4, single buffered']
    #allocation9 [shape = 's32[1]{0}', space=sflag, size = 0x4, scoped, tag = 'scoped memory for tpu_custom_call.1']
    #allocation10 [shape = 'u8[16384]{0}', space=vmem, size = 0x4000, scoped, tag = 'input window, operand 6, single buffered']
    #allocation11 [shape = 'u8[4096]{0}', space=vmem, size = 0x1000, scoped, tag = 'output window, operand 0, single buffered']
    %13 = vsyncpa [#allocation3], 0
    %14 = vsyncpa [#allocation6], 0
    %15 = vsyncpa [#allocation9], 0
    %16 = vsyncpa [#allocation4], 0
    // Predicated region
    $region2: #{tpu_custom_call.1} parent=1 // pred_check
      _
    $region3: #{tpu_custom_call.1} parent=1 // pred_check_branch
      %18 = sbr.rel (0) target = $region5
    $region4: #{tpu_custom_call.1} parent=1 // pred_region
      %s20 = ssub.s32 128, 128
      %21 = vsyncadd [#allocation3], %s20
      %s23 = sshll.u32 [#allocation2], 4
      %s24 = int_to_ptr.vmem [resolvable:$true] %s23
      %26 = dma.hbm_to_vmem [thread:$0]  %s0, 128, %s24, [#allocation3]
    $region5: #{tpu_custom_call.1} parent=1 // pred_fallthru
      _
    // Predicated region
    $region6: #{tpu_custom_call.1} parent=1 // pred_check
      _
    $region7: #{tpu_custom_call.1} parent=1 // pred_check_branch
      %28 = sbr.rel (0) target = $region9
    $region8: #{tpu_custom_call.1} parent=1 // pred_region
      %s30 = ssub.s32 256, 256
      %31 = vsyncadd [#allocation6], %s30
      %s32 = sshll.u32 [#allocation5], 4
      %s33 = int_to_ptr.vmem [resolvable:$true] %s32
      %38 = dma.hbm_to_vmem [thread:$0]  %s1, 256, %s33, [#allocation6], 128, 128, 8
    $region9: #{tpu_custom_call.1} parent=1 // pred_fallthru
      _
    // Predicated region
    $region10: #{tpu_custom_call.1} parent=1 // pred_check
      _
    $region11: #{tpu_custom_call.1} parent=1 // pred_check_branch
      %40 = sbr.rel (0) target = $region13
    $region12: #{tpu_custom_call.1} parent=1 // pred_region
      %s42 = ssub.s32 512, 512
      %43 = vsyncadd [#allocation6], %s42
      %s44 = sshll.u32 [#allocation7], 4
      %s45 = int_to_ptr.vmem [resolvable:$true] %s44
      %50 = dma.hbm_to_vmem [thread:$0]  %s2, 512, %s45, [#allocation6], 128, 128, 8
    $region13: #{tpu_custom_call.1} parent=1 // pred_fallthru
      _
    // Predicated region
    $region14: #{tpu_custom_call.1} parent=1 // pred_check
      _
    $region15: #{tpu_custom_call.1} parent=1 // pred_check_branch
      %52 = sbr.rel (0) target = $region17
    $region16: #{tpu_custom_call.1} parent=1 // pred_region
      _
    $region17: #{tpu_custom_call.1} parent=1 // pred_fallthru
      _
    // Predicated region
    $region18: #{tpu_custom_call.1} parent=1 // pred_check
      _
    $region19: #{tpu_custom_call.1} parent=1 // pred_check_branch
      %54 = sbr.rel (0) target = $region21
    $region20: #{tpu_custom_call.1} parent=1 // pred_region
      %s56 = ssub.s32 512, 512
      %57 = vsyncadd [#allocation9], %s56
      %s58 = sshll.u32 [#allocation8], 4
      %s59 = int_to_ptr.vmem [resolvable:$true] %s58
      %64 = dma.hbm_to_vmem [thread:$0]  %s4, 512, %s59, [#allocation9], 128, 128, 8
    $region21: #{tpu_custom_call.1} parent=1 // pred_fallthru
      _
    // Predicated region
    $region22: #{tpu_custom_call.1} parent=1 // pred_check
      _
    $region23: #{tpu_custom_call.1} parent=1 // pred_check_branch
      %66 = sbr.rel (0) target = $region25
    $region24: #{tpu_custom_call.1} parent=1 // pred_region
      _
    $region25: #{tpu_custom_call.1} parent=1 // pred_fallthru
      _
    // Predicated region
    $region26: #{tpu_custom_call.1} parent=1 // pred_check
      _
    $region27: #{tpu_custom_call.1} parent=1 // pred_check_branch
      %68 = sbr.rel (0) target = $region29
    $region28: #{tpu_custom_call.1} parent=1 // pred_region
      %s70 = ssub.s32 512, 512
      %71 = vsyncadd [#allocation9], %s70
      %s72 = sshll.u32 [#allocation10], 4
      %s73 = int_to_ptr.vmem [resolvable:$true] %s72
      %78 = dma.hbm_to_vmem [thread:$0]  %s6, 512, %s73, [#allocation9], 128, 128, 8
    $region29: #{tpu_custom_call.1} parent=1 // pred_fallthru
      _
    // Predicated region
    $region30: #{tpu_custom_call.1} parent=1 // pred_check
      _
    $region31: #{tpu_custom_call.1} parent=1 // pred_check_branch
      %80 = sbr.rel (0) target = $region33
    $region32: #{tpu_custom_call.1} parent=1 // pred_region
      _
    $region33: #{tpu_custom_call.1} parent=1 // pred_fallthru
      _
    // Predicated region
    $region34: #{tpu_custom_call.1} parent=1 // pred_check
      _
    $region35: #{tpu_custom_call.1} parent=1 // pred_check_branch
      %82 = sbr.rel (0) target = $region37
    $region36: #{tpu_custom_call.1} parent=1 // pred_region
      %83 = dma.done [#allocation3], 128
    $region37: #{tpu_custom_call.1} parent=1 // pred_fallthru
      _
    // Predicated region
    $region38: #{tpu_custom_call.1} parent=1 // pred_check
      _
    $region39: #{tpu_custom_call.1} parent=1 // pred_check_branch
      %85 = sbr.rel (0) target = $region41
    $region40: #{tpu_custom_call.1} parent=1 // pred_region
      %86 = dma.done [#allocation6], 256
    $region41: #{tpu_custom_call.1} parent=1 // pred_fallthru
      _
    // Predicated region
    $region42: #{tpu_custom_call.1} parent=1 // pred_check
      _
    $region43: #{tpu_custom_call.1} parent=1 // pred_check_branch
      %88 = sbr.rel (0) target = $region45
    $region44: #{tpu_custom_call.1} parent=1 // pred_region
      %89 = dma.done [#allocation6], 512
    $region45: #{tpu_custom_call.1} parent=1 // pred_fallthru
      _
    // Predicated region
    $region46: #{tpu_custom_call.1} parent=1 // pred_check
      _
    $region47: #{tpu_custom_call.1} parent=1 // pred_check_branch
      %91 = sbr.rel (0) target = $region49
    $region48: #{tpu_custom_call.1} parent=1 // pred_region
      %92 = dma.done [#allocation9], 512
    $region49: #{tpu_custom_call.1} parent=1 // pred_fallthru
      _
    // Predicated region
    $region50: #{tpu_custom_call.1} parent=1 // pred_check
      _
    $region51: #{tpu_custom_call.1} parent=1 // pred_check_branch
      %94 = sbr.rel (0) target = $region53
    $region52: #{tpu_custom_call.1} parent=1 // pred_region
      %95 = dma.done [#allocation9], 512
    $region53: #{tpu_custom_call.1} parent=1 // pred_fallthru
      _
    %v96 = vld [vmem:[#allocation2] sm:$0xff]
    %v97 = vld [vmem:[#allocation5] sm:$0xff]
    %v98 = vld [vmem:[#allocation5 + $0x8] sm:$0xf]
    %vm99 = vcmask 97280
    %v101 = vsel %vm99, %v96, 0
    %vm103 = vcmask 1043456
    %v105 = vsel %vm103, %v98, 0
    %107 = vmatprep.subr.mxu0 0.0
    %108 = vmatpush1.msra.mxu0 %v97
    %109 = vmatprep.subr.mxu0 0.0
    %110 = vmatpush1.msra.mxu0 %v105
    %111 = vmatprep.subr.mxu0 0.0
    %112 = vmatpush1.msra.mxu0 0.0
    %113 = vmatprep.subr.mxu0 0.0
    %114 = vmatpush1.msra.mxu0 0.0
    %115 = vmatprep.subr.mxu0 0.0
    %116 = vmatpush1.msra.mxu0 0.0
    %117 = vmatprep.subr.mxu0 0.0
    %118 = vmatpush1.msra.mxu0 0.0
    %119 = vmatprep.subr.mxu0 0.0
    %120 = vmatpush1.msra.mxu0 0.0
    %121 = vmatprep.subr.mxu0 0.0
    %122 = vmatpush1.msra.mxu0 0.0
    %123 = vmatprep.subr.mxu0 0.0
    %124 = vmatpush1.msra.mxu0 0.0
    %125 = vmatprep.subr.mxu0 0.0
    %126 = vmatpush1.msra.mxu0 0.0
    %127 = vmatprep.subr.mxu0 0.0
    %128 = vmatpush1.msra.mxu0 0.0
    %129 = vmatprep.subr.mxu0 0.0
    %130 = vmatpush1.msra.mxu0 0.0
    %131 = vmatprep.subr.mxu0 0.0
    %132 = vmatpush1.msra.mxu0 0.0
    %133 = vmatprep.subr.mxu0 0.0
    %134 = vmatpush1.msra.mxu0 0.0
    %135 = vmatprep.subr.mxu0 0.0
    %136 = vmatpush1.msra.mxu0 0.0
    %137 = vmatprep.subr.mxu0 0.0
    %138 = vmatpush1.msra.mxu0 0.0
    %139 = vmatprep.subr.mxu0 0.0
    %140 = vmatpush1.msra.mxu0 0.0
    %141 = vmatprep.subr.mxu0 0.0
    %142 = vmatpush1.msra.mxu0 0.0
    %143 = vmatprep.subr.mxu0 0.0
    %144 = vmatpush1.msra.mxu0 0.0
    %145 = vmatprep.subr.mxu0 0.0
    %146 = vmatpush1.msra.mxu0 0.0
    %147 = vmatprep.subr.mxu0 0.0
    %148 = vmatpush1.msra.mxu0 0.0
    %149 = vmatprep.subr.mxu0 0.0
    %150 = vmatpush1.msra.mxu0 0.0
    %151 = vmatprep.subr.mxu0 0.0
    %152 = vmatpush1.msra.mxu0 0.0
    %153 = vmatprep.subr.mxu0 0.0
    %154 = vmatpush1.msra.mxu0 0.0
    %155 = vmatprep.subr.mxu0 0.0
    %156 = vmatpush1.msra.mxu0 0.0
    %157 = vmatprep.subr.mxu0 0.0
    %158 = vmatpush1.msra.mxu0 0.0
    %159 = vmatprep.subr.mxu0 0.0
    %160 = vmatpush1.msra.mxu0 0.0
    %161 = vmatprep.subr.mxu0 0.0
    %162 = vmatpush1.msra.mxu0 0.0
    %163 = vmatprep.subr.mxu0 0.0
    %164 = vmatpush1.msra.mxu0 0.0
    %165 = vmatprep.subr.mxu0 0.0
    %166 = vmatpush1.msra.mxu0 0.0
    %167 = vmatprep.subr.mxu0 0.0
    %168 = vmatpush1.msra.mxu0 0.0
    %169 = vmatprep.subr.mxu0 0.0
    %170 = vmatpush1.msra.mxu0 0.0
    %171 = vmatprep.mubr.f32.mxu0 0.0
    %172 = vmatmul.mubr.f32.gmra.mrb[0].mxu0 %v101
    %v173 = vpop.f32.mrb[0].mxu0
    %v174 = vadd.f32 0.0, %v173
    %v175 = vpop.f32.mrb[0].mxu0
    %176 = vdwg.mxu0
    %v177 = vld [vmem:[#allocation7] sm:$0xff]
    %v178 = vld [vmem:[#allocation7 + $0x8] sm:$0xff]
    %v179 = vld [vmem:[#allocation7 + $0x10] sm:$0xff]
    %v180 = vld [vmem:[#allocation7 + $0x18] sm:$0xff]
    %v181 = vld [vmem:[%s3] sm:$0x1]
    %v183 = vlaneseq
    %v184 = vshrl.u32 %v183, 7
    %v185 = vsub.s32 0, %v184
    %v186 = vrot.slane %v181, %v185
    %vm188 = vcmask 261120
    %v190 = vsel %vm188, %v174, 0
    %192 = vmatprep.subr.mxu0 0.0
    %193 = vmatpush1.msra.mxu0 %v177
    %194 = vmatprep.subr.mxu0 0.0
    %195 = vmatpush1.msra.mxu0 %v178
    %196 = vmatprep.subr.mxu0 0.0
    %197 = vmatpush1.msra.mxu0 %v179
    %198 = vmatprep.subr.mxu0 0.0
    %199 = vmatpush1.msra.mxu0 %v180
    %200 = vmatprep.subr.mxu0 0.0
    %201 = vmatpush1.msra.mxu0 0.0
    %202 = vmatprep.subr.mxu0 0.0
    %203 = vmatpush1.msra.mxu0 0.0
    %204 = vmatprep.subr.mxu0 0.0
    %205 = vmatpush1.msra.mxu0 0.0
    %206 = vmatprep.subr.mxu0 0.0
    %207 = vmatpush1.msra.mxu0 0.0
    %208 = vmatprep.subr.mxu0 0.0
    %209 = vmatpush1.msra.mxu0 0.0
    %210 = vmatprep.subr.mxu0 0.0
    %211 = vmatpush1.msra.mxu0 0.0
    %212 = vmatprep.subr.mxu0 0.0
    %213 = vmatpush1.msra.mxu0 0.0
    %214 = vmatprep.subr.mxu0 0.0
    %215 = vmatpush1.msra.mxu0 0.0
    %216 = vmatprep.subr.mxu0 0.0
    %217 = vmatpush1.msra.mxu0 0.0
    %218 = vmatprep.subr.mxu0 0.0
    %219 = vmatpush1.msra.mxu0 0.0
    %220 = vmatprep.subr.mxu0 0.0
    %221 = vmatpush1.msra.mxu0 0.0
    %222 = vmatprep.subr.mxu0 0.0
    %223 = vmatpush1.msra.mxu0 0.0
    %224 = vmatprep.subr.mxu0 0.0
    %225 = vmatpush1.msra.mxu0 0.0
    %226 = vmatprep.subr.mxu0 0.0
    %227 = vmatpush1.msra.mxu0 0.0
    %228 = vmatprep.subr.mxu0 0.0
    %229 = vmatpush1.msra.mxu0 0.0
    %230 = vmatprep.subr.mxu0 0.0
    %231 = vmatpush1.msra.mxu0 0.0
    %232 = vmatprep.subr.mxu0 0.0
    %233 = vmatpush1.msra.mxu0 0.0
    %234 = vmatprep.subr.mxu0 0.0
    %235 = vmatpush1.msra.mxu0 0.0
    %236 = vmatprep.subr.mxu0 0.0
    %237 = vmatpush1.msra.mxu0 0.0
    %238 = vmatprep.subr.mxu0 0.0
    %239 = vmatpush1.msra.mxu0 0.0
    %240 = vmatprep.subr.mxu0 0.0
    %241 = vmatpush1.msra.mxu0 0.0
    %242 = vmatprep.subr.mxu0 0.0
    %243 = vmatpush1.msra.mxu0 0.0
    %244 = vmatprep.subr.mxu0 0.0
    %245 = vmatpush1.msra.mxu0 0.0
    %246 = vmatprep.subr.mxu0 0.0
    %247 = vmatpush1.msra.mxu0 0.0
    %248 = vmatprep.subr.mxu0 0.0
    %249 = vmatpush1.msra.mxu0 0.0
    %250 = vmatprep.subr.mxu0 0.0
    %251 = vmatpush1.msra.mxu0 0.0
    %252 = vmatprep.subr.mxu0 0.0
    %253 = vmatpush1.msra.mxu0 0.0
    %254 = vmatprep.subr.mxu0 0.0
    %255 = vmatpush1.msra.mxu0 0.0
    %256 = vmatprep.mubr.f32.mxu0 0.0
    %257 = vmatmul.mubr.f32.gmra.mrb[0].mxu0 %v190
    %v258 = vpop.f32.mrb[0].mxu0
    %v259 = vadd.f32 %v186, %v258
    %v260 = vpop.f32.mrb[0].mxu0
    %261 = vdwg.mxu0
    %v262 = vmax.f32 %v259, 0.0
    %v263 = vld [vmem:[#allocation8] sm:$0xff]
    %v264 = vld [vmem:[#allocation8 + $0x8] sm:$0xff]
    %v265 = vld [vmem:[#allocation8 + $0x10] sm:$0xff]
    %v266 = vld [vmem:[#allocation8 + $0x18] sm:$0xff]
    %v267 = vld [vmem:[%s5] sm:$0x1]
    %v269 = vlaneseq
    %v270 = vshrl.u32 %v269, 7
    %v271 = vsub.s32 0, %v270
    %v272 = vrot.slane %v267, %v271
    %v275 = vsel %vm188, %v262, 0
    %277 = vmatprep.subr.mxu0 0.0
    %278 = vmatpush1.msra.mxu0 %v263
    %279 = vmatprep.subr.mxu0 0.0
    %280 = vmatpush1.msra.mxu0 %v264
    %281 = vmatprep.subr.mxu0 0.0
    %282 = vmatpush1.msra.mxu0 %v265
    %283 = vmatprep.subr.mxu0 0.0
    %284 = vmatpush1.msra.mxu0 %v266
    %285 = vmatprep.subr.mxu0 0.0
    %286 = vmatpush1.msra.mxu0 0.0
    %287 = vmatprep.subr.mxu0 0.0
    %288 = vmatpush1.msra.mxu0 0.0
    %289 = vmatprep.subr.mxu0 0.0
    %290 = vmatpush1.msra.mxu0 0.0
    %291 = vmatprep.subr.mxu0 0.0
    %292 = vmatpush1.msra.mxu0 0.0
    %293 = vmatprep.subr.mxu0 0.0
    %294 = vmatpush1.msra.mxu0 0.0
    %295 = vmatprep.subr.mxu0 0.0
    %296 = vmatpush1.msra.mxu0 0.0
    %297 = vmatprep.subr.mxu0 0.0
    %298 = vmatpush1.msra.mxu0 0.0
    %299 = vmatprep.subr.mxu0 0.0
    %300 = vmatpush1.msra.mxu0 0.0
    %301 = vmatprep.subr.mxu0 0.0
    %302 = vmatpush1.msra.mxu0 0.0
    %303 = vmatprep.subr.mxu0 0.0
    %304 = vmatpush1.msra.mxu0 0.0
    %305 = vmatprep.subr.mxu0 0.0
    %306 = vmatpush1.msra.mxu0 0.0
    %307 = vmatprep.subr.mxu0 0.0
    %308 = vmatpush1.msra.mxu0 0.0
    %309 = vmatprep.subr.mxu0 0.0
    %310 = vmatpush1.msra.mxu0 0.0
    %311 = vmatprep.subr.mxu0 0.0
    %312 = vmatpush1.msra.mxu0 0.0
    %313 = vmatprep.subr.mxu0 0.0
    %314 = vmatpush1.msra.mxu0 0.0
    %315 = vmatprep.subr.mxu0 0.0
    %316 = vmatpush1.msra.mxu0 0.0
    %317 = vmatprep.subr.mxu0 0.0
    %318 = vmatpush1.msra.mxu0 0.0
    %319 = vmatprep.subr.mxu0 0.0
    %320 = vmatpush1.msra.mxu0 0.0
    %321 = vmatprep.subr.mxu0 0.0
    %322 = vmatpush1.msra.mxu0 0.0
    %323 = vmatprep.subr.mxu0 0.0
    %324 = vmatpush1.msra.mxu0 0.0
    %325 = vmatprep.subr.mxu0 0.0
    %326 = vmatpush1.msra.mxu0 0.0
    %327 = vmatprep.subr.mxu0 0.0
    %328 = vmatpush1.msra.mxu0 0.0
    %329 = vmatprep.subr.mxu0 0.0
    %330 = vmatpush1.msra.mxu0 0.0
    %331 = vmatprep.subr.mxu0 0.0
    %332 = vmatpush1.msra.mxu0 0.0
    %333 = vmatprep.subr.mxu0 0.0
    %334 = vmatpush1.msra.mxu0 0.0
    %335 = vmatprep.subr.mxu0 0.0
    %336 = vmatpush1.msra.mxu0 0.0
    %337 = vmatprep.subr.mxu0 0.0
    %338 = vmatpush1.msra.mxu0 0.0
    %339 = vmatprep.subr.mxu0 0.0
    %340 = vmatpush1.msra.mxu0 0.0
    %341 = vmatprep.mubr.f32.mxu0 0.0
    %342 = vmatmul.mubr.f32.gmra.mrb[0].mxu0 %v275
    %v343 = vpop.f32.mrb[0].mxu0
    %v344 = vadd.f32 %v272, %v343
    %v345 = vpop.f32.mrb[0].mxu0
    %346 = vdwg.mxu0
    %v347 = vmax.f32 %v344, 0.0
    %v348 = vld [vmem:[#allocation10] sm:$0xff]
    %v349 = vld [vmem:[#allocation10 + $0x8] sm:$0xff]
    %v350 = vld [vmem:[#allocation10 + $0x10] sm:$0xff]
    %v351 = vld [vmem:[#allocation10 + $0x18] sm:$0xff]
    %v352 = vld [vmem:[%s7] sm:$0x1]
    %v354 = vlaneseq
    %v355 = vshrl.u32 %v354, 7
    %v356 = vsub.s32 0, %v355
    %v357 = vrot.slane %v352, %v356
    %v360 = vsel %vm188, %v347, 0
    %362 = vmatprep.subr.mxu0 0.0
    %363 = vmatpush1.msra.mxu0 %v348
    %364 = vmatprep.subr.mxu0 0.0
    %365 = vmatpush1.msra.mxu0 %v349
    %366 = vmatprep.subr.mxu0 0.0
    %367 = vmatpush1.msra.mxu0 %v350
    %368 = vmatprep.subr.mxu0 0.0
    %369 = vmatpush1.msra.mxu0 %v351
    %370 = vmatprep.subr.mxu0 0.0
    %371 = vmatpush1.msra.mxu0 0.0
    %372 = vmatprep.subr.mxu0 0.0
    %373 = vmatpush1.msra.mxu0 0.0
    %374 = vmatprep.subr.mxu0 0.0
    %375 = vmatpush1.msra.mxu0 0.0
    %376 = vmatprep.subr.mxu0 0.0
    %377 = vmatpush1.msra.mxu0 0.0
    %378 = vmatprep.subr.mxu0 0.0
    %379 = vmatpush1.msra.mxu0 0.0
    %380 = vmatprep.subr.mxu0 0.0
    %381 = vmatpush1.msra.mxu0 0.0
    %382 = vmatprep.subr.mxu0 0.0
    %383 = vmatpush1.msra.mxu0 0.0
    %384 = vmatprep.subr.mxu0 0.0
    %385 = vmatpush1.msra.mxu0 0.0
    %386 = vmatprep.subr.mxu0 0.0
    %387 = vmatpush1.msra.mxu0 0.0
    %388 = vmatprep.subr.mxu0 0.0
    %389 = vmatpush1.msra.mxu0 0.0
    %390 = vmatprep.subr.mxu0 0.0
    %391 = vmatpush1.msra.mxu0 0.0
    %392 = vmatprep.subr.mxu0 0.0
    %393 = vmatpush1.msra.mxu0 0.0
    %394 = vmatprep.subr.mxu0 0.0
    %395 = vmatpush1.msra.mxu0 0.0
    %396 = vmatprep.subr.mxu0 0.0
    %397 = vmatpush1.msra.mxu0 0.0
    %398 = vmatprep.subr.mxu0 0.0
    %399 = vmatpush1.msra.mxu0 0.0
    %400 = vmatprep.subr.mxu0 0.0
    %401 = vmatpush1.msra.mxu0 0.0
    %402 = vmatprep.subr.mxu0 0.0
    %403 = vmatpush1.msra.mxu0 0.0
    %404 = vmatprep.subr.mxu0 0.0
    %405 = vmatpush1.msra.mxu0 0.0
    %406 = vmatprep.subr.mxu0 0.0
    %407 = vmatpush1.msra.mxu0 0.0
    %408 = vmatprep.subr.mxu0 0.0
    %409 = vmatpush1.msra.mxu0 0.0
    %410 = vmatprep.subr.mxu0 0.0
    %411 = vmatpush1.msra.mxu0 0.0
    %412 = vmatprep.subr.mxu0 0.0
    %413 = vmatpush1.msra.mxu0 0.0
    %414 = vmatprep.subr.mxu0 0.0
    %415 = vmatpush1.msra.mxu0 0.0
    %416 = vmatprep.subr.mxu0 0.0
    %417 = vmatpush1.msra.mxu0 0.0
    %418 = vmatprep.subr.mxu0 0.0
    %419 = vmatpush1.msra.mxu0 0.0
    %420 = vmatprep.subr.mxu0 0.0
    %421 = vmatpush1.msra.mxu0 0.0
    %422 = vmatprep.subr.mxu0 0.0
    %423 = vmatpush1.msra.mxu0 0.0
    %424 = vmatprep.subr.mxu0 0.0
    %425 = vmatpush1.msra.mxu0 0.0
    %426 = vmatprep.mubr.f32.mxu0 0.0
    %427 = vmatmul.mubr.f32.gmra.mrb[0].mxu0 %v360
    %v428 = vpop.f32.mrb[0].mxu0
    %v429 = vadd.f32 %v357, %v428
    %v430 = vpop.f32.mrb[0].mxu0
    %431 = vdwg.mxu0
    %432 = vst [vmem:[#allocation11] sm:$0xff] %v429
    // Predicated region
    $region54: #{tpu_custom_call.1} parent=1 // pred_check
      _
    $region55: #{tpu_custom_call.1} parent=1 // pred_check_branch
      %434 = sbr.rel (0) target = $region57
    $region56: #{tpu_custom_call.1} parent=1 // pred_region
      %s436 = ssub.s32 128, 128
      %437 = vsyncadd [#allocation4], %s436
      %s439 = sshll.u32 [#allocation11], 4
      %s440 = int_to_ptr.vmem [resolvable:$true] %s439
      %442 = dma.vmem_to_hbm [thread:$0]  %s440, 128, %s8, [#allocation4]
    $region57: #{tpu_custom_call.1} parent=1 // pred_fallthru
      _
    // Predicated region
    $region58: #{tpu_custom_call.1} parent=1 // pred_check
      _
    $region59: #{tpu_custom_call.1} parent=1 // pred_check_branch
      %444 = sbr.rel (0) target = $region61
    $region60: #{tpu_custom_call.1} parent=1 // pred_region
      %445 = dma.done [#allocation4], 128
    $region61: #{tpu_custom_call.1} parent=1 // pred_fallthru
      _
    %446 = vsyncpa [#allocation3], 1
    %447 = vsyncpa [#allocation6], 1
    %448 = vsyncpa [#allocation9], 1
    %449 = vsyncpa [#allocation4], 1

</llo_original>
